<compile_context>
chip_gen: v6e
topology: v6e:2x2x1
jax: 0.10.0
libtpu: 0.0.40
codegen_flags: <defaults>
</compile_context>

<pallas_src>
import math

import jax
import jax.numpy as jnp
from jax import lax
from jax.experimental import pallas as pl
from jax.experimental.pallas import tpu as pltpu


# --------------------------------------------------------------------------- #
# Kernel
# --------------------------------------------------------------------------- #
def data_embedding_kernel(x_ref, halo_ref, w_ref, pe_ref, o_ref):
    """One grid step = one (batch, L-tile) pair.

    x_ref   : (1, TL, C)    x tile (seq on sublanes, channels on lanes)
    halo_ref: (1, 1, 2, C)  circular halo rows [x[(start-1)%L], x[(start+TL)%L]]
    w_ref   : (3, C, Dp)    conv taps (tap k right-multiplies), zero-padded lanes
    pe_ref  : (TL, Dp)      positional embedding + conv bias, zero-padded lanes
    o_ref   : (1, TL, Dp)   output tile (lane-dense: Dp is a multiple of 128)
    """
    x = x_ref[0]                     # (TL, C)
    halo = halo_ref[0, 0]            # (2, C)
    tl = x.shape[0]

    # x_prev[t] = x[(t-1) % L], x_next[t] = x[(t+1) % L]:
    # roll within the tile (XLU, cheap), then patch the wrap-around row with the halo.
    rows = lax.broadcasted_iota(jnp.int32, x.shape, 0)
    x_prev = jnp.where(rows == 0, halo[0:1, :], pltpu.roll(x, shift=1, axis=0))
    x_next = jnp.where(rows == tl - 1, halo[1:2, :],
                       pltpu.roll(x, shift=tl - 1, axis=0))

    # Circular k=3 conv expressed as three per-tap MXU matmuls (memory-bound op;
    # the MXU is far from the bottleneck, so no need to fuse the contraction).
    out = (jnp.dot(x_prev, w_ref[0], preferred_element_type=jnp.float32)
           + jnp.dot(x, w_ref[1], preferred_element_type=jnp.float32)
           + jnp.dot(x_next, w_ref[2], preferred_element_type=jnp.float32))

    # TODO(synk): nn.Dropout(p=0.1) is identity in eval mode (implemented here);
    # training-mode dropout would need pltpu.prng_seed + pltpu.prng_random_bits.
    o_ref[0] = (out + pe_ref[...]).astype(o_ref.dtype)


# --------------------------------------------------------------------------- #
# Wrapper
# --------------------------------------------------------------------------- #
def make_positional_embedding(seq_len, d_model):
    """Same recipe as PositionalEmbedding.__init__, truncated to seq_len."""
    position = jnp.arange(seq_len, dtype=jnp.float32)[:, None]
    div_term = jnp.exp(jnp.arange(0, d_model, 2, dtype=jnp.float32)
                       * (-(math.log(10000.0) / d_model)))
    angles = position * div_term                                   # (L, ceil(D/2))
    pe = jnp.zeros((seq_len, d_model), jnp.float32)
    n_odd = pe[:, 1::2].shape[1]
    pe = pe.at[:, 0::2].set(jnp.sin(angles))
    pe = pe.at[:, 1::2].set(jnp.cos(angles)[:, :n_odd])
    return pe


def prepare_params(conv_w, conv_b, seq_len):
    """Hoisted, one-time param prep: transpose taps, fold bias into pe, pad lanes.

    conv_w: (D, C, 3), conv_b: (D,).  Returns (w_taps (3, C, Dp), pe_plus_bias (L, Dp)).
    """
    d_model, _, k = conv_w.shape
    assert k == 3, "TokenEmbedding uses kernel_size=3"
    d_pad = d_model if d_model % 128 == 0 else ((d_model + 127) // 128) * 128

    w_taps = jnp.transpose(conv_w, (2, 1, 0)).astype(jnp.float32)   # (3, C, D)
    pe_pb = (make_positional_embedding(seq_len, d_model)
             + conv_b.astype(jnp.float32)[None, :])                 # bias folded in
    if d_pad != d_model:
        w_taps = jnp.pad(w_taps, ((0, 0), (0, 0), (0, d_pad - d_model)))
        pe_pb = jnp.pad(pe_pb, ((0, 0), (0, d_pad - d_model)))
    return w_taps, pe_pb


def _block_spec(shape, index_map, single_buffer=False):
    if single_buffer:
        try:
            # Loop-invariant operand: one VMEM buffer instead of two.
            return pl.BlockSpec(shape, index_map, pipeline_mode=pl.Buffered(1))
        except Exception:   # pipeline_mode unsupported on this jax version
            pass
    return pl.BlockSpec(shape, index_map)


def _choose_l_tile(seq_len, c_in, d_pad, budget_bytes=24 * 1024 * 1024):
    """Largest L-tile (multiple of 8 dividing L) whose per-step VMEM fits the budget."""
    def step_bytes(tl, n_tiles):
        pe_bufs = 1 if n_tiles == 1 else 2
        return 4 * (2 * tl * c_in          # x (double buffered)
                    + 2 * tl * d_pad       # out (double buffered)
                    + pe_bufs * tl * d_pad  # pe (+bias)
                    + 3 * c_in * d_pad     # conv taps (single buffered)
                    + 2 * 2 * c_in)        # halo rows
    if step_bytes(seq_len, 1) <= budget_bytes:
        return seq_len
    for tl in range(8 * (seq_len // 8), 0, -8):
        if seq_len % tl == 0 and step_bytes(tl, seq_len // tl) <= budget_bytes:
            return tl
    return seq_len


def _forward(x, w_taps, pe_pb, d_model, l_tile, single_buffer):
    b, seq_len, c_in = x.shape
    _, _, d_pad = w_taps.shape
    x = x.astype(jnp.float32)

    tl = l_tile if l_tile is not None else _choose_l_tile(seq_len, c_in, d_pad)
    if seq_len % tl != 0:
        tl = seq_len
    n_lt = seq_len // tl

    # Circular halo rows per L-tile: left = x[(start-1)%L], right = x[(start+TL)%L].
    starts = jnp.arange(n_lt) * tl
    left = jnp.take(x, (starts - 1) % seq_len, axis=1)     # (B, n_lt, C)
    right = jnp.take(x, (starts + tl) % seq_len, axis=1)   # (B, n_lt, C)
    halo = jnp.stack([left, right], axis=2)                # (B, n_lt, 2, C)

    pe_invariant = (n_lt == 1)

    out = pl.pallas_call(
        data_embedding_kernel,
        out_shape=jax.ShapeDtypeStruct((b, seq_len, d_pad), jnp.float32),
        grid_spec=pltpu.PrefetchScalarGridSpec(
            num_scalar_prefetch=0,
            grid=(b, n_lt),
            in_specs=[
                pl.BlockSpec((1, tl, c_in), lambda bi, lt: (bi, lt, 0)),
                pl.BlockSpec((1, 1, 2, c_in), lambda bi, lt: (bi, lt, 0, 0)),
                _block_spec((3, c_in, d_pad), lambda bi, lt: (0, 0, 0),
                            single_buffer=single_buffer),
                _block_spec((tl, d_pad), lambda bi, lt: (lt, 0),
                            single_buffer=single_buffer and pe_invariant),
            ],
            out_specs=pl.BlockSpec((1, tl, d_pad), lambda bi, lt: (bi, lt, 0)),
        ),
        compiler_params=pltpu.CompilerParams(
            dimension_semantics=("parallel", "parallel"),
            vmem_limit_bytes=64 * 1024 * 1024),
    )(x, halo, w_taps, pe_pb)

    return out if d_pad == d_model else out[..., :d_model]


def data_embedding_static(x, w_taps, pe_pb, d_model, *, l_tile=None):
    """x: (B, L, C_in) f32 -> (B, L, d_model) f32 (eval-mode forward)."""
    try:
        return _forward(x, w_taps, pe_pb, d_model, l_tile, single_buffer=True)
    except Exception:
        # Fallback if Buffered(1) single-buffering is rejected by this jax build.
        return _forward(x, w_taps, pe_pb, d_model, l_tile, single_buffer=False)


# --------------------------------------------------------------------------- #
# Test
# --------------------------------------------------------------------------- #
def _reference(x, conv_w, conv_b, pe):
    xp = jnp.transpose(x, (0, 2, 1))                                    # (B, C, L)
    xpad = jnp.concatenate([xp[:, :, -1:], xp, xp[:, :, :1]], axis=-1)  # circular pad 1
    ref = lax.conv_general_dilated(
        xpad, conv_w, window_strides=(1,), padding="VALID",
        dimension_numbers=("NCH", "OIH", "NCH"))                        # (B, D, L)
    return jnp.transpose(ref, (0, 2, 1)) + conv_b[None, None, :] + pe[None]


if __name__ == "__main__":
    key = jax.random.PRNGKey(0)

    # case 1: single L tile; case 2: L tiled (exercises the circular-halo path).
    cases = [
        dict(B=2, L=8, C_IN=4, D_MODEL=32, l_tile=None),
        dict(B=2, L=16, C_IN=4, D_MODEL=32, l_tile=8),
    ]

    for i, cfg in enumerate(cases):
        B, L, C_IN, D_MODEL = cfg["B"], cfg["L"], cfg["C_IN"], cfg["D_MODEL"]
        kx, kw, kb, key = jax.random.split(jax.random.fold_in(key, i), 4)

        x = jax.random.normal(kx, (B, L, C_IN), jnp.float32)

        # Conv1d(C_IN, D_MODEL, kernel_size=3) params, kaiming_normal fan_in init.
        fan_in = C_IN * 3
        conv_w = (jax.random.normal(kw, (D_MODEL, C_IN, 3), jnp.float32)
                  * math.sqrt(2.0 / fan_in))
        bound = 1.0 / math.sqrt(fan_in)
        conv_b = jax.random.uniform(kb, (D_MODEL,), jnp.float32, -bound, bound)

        w_taps, pe_pb = prepare_params(conv_w, conv_b, L)
        out = jax.block_until_ready(
            data_embedding_static(x, w_taps, pe_pb, D_MODEL, l_tile=cfg["l_tile"]))

        ref = _reference(x, conv_w, conv_b, make_positional_embedding(L, D_MODEL))
        assert out.shape == (B, L, D_MODEL), out.shape
        assert jnp.allclose(out, ref, atol=1e-4, rtol=1e-4), \
            (i, float(jnp.max(jnp.abs(out - ref))))

    print("KERNEL_OK")
</pallas_src>

<mosaic_0001>
module attributes {stable_mosaic.version = 11 : i64} {
  func.func @data_embedding_kernel(%arg0: i32, %arg1: i32, %arg2: memref<1x8x4xf32, #tpu.memory_space<vmem>>, %arg3: memref<1x1x2x4xf32, #tpu.memory_space<vmem>>, %arg4: memref<3x4x128xf32, #tpu.memory_space<vmem>>, %arg5: memref<8x128xf32, #tpu.memory_space<vmem>>, %arg6: memref<1x8x128xf32, #tpu.memory_space<vmem>>) attributes {dimension_semantics = [#tpu.dimension_semantics<parallel>, #tpu.dimension_semantics<parallel>], iteration_bounds = array<i64: 2, 1>, scalar_prefetch = 0 : i64, scratch_operands = 0 : i64, tpu.core_type = #tpu.core_type<tc>, window_params = [{transform_indices = @transform_0, window_bounds = array<i64: 1, 8, 4>}, {transform_indices = @transform_1, window_bounds = array<i64: 1, 1, 2, 4>}, {pipeline_mode = #tpu.pipeline_mode<synchronous>, transform_indices = @transform_2, window_bounds = array<i64: 3, 4, 128>}, {pipeline_mode = #tpu.pipeline_mode<synchronous>, transform_indices = @transform_3, window_bounds = array<i64: 8, 128>}, {transform_indices = @transform_4, window_bounds = array<i64: 1, 8, 128>}]} {
    %c0 = arith.constant 0 : index
    %c0_0 = arith.constant 0 : index
    %c0_1 = arith.constant 0 : index
    %0 = vector.load %arg2[%c0, %c0_0, %c0_1] : memref<1x8x4xf32, #tpu.memory_space<vmem>>, vector<1x8x4xf32>
    %1 = vector.shape_cast %0 : vector<1x8x4xf32> to vector<8x4xf32>
    %c0_2 = arith.constant 0 : index
    %c0_3 = arith.constant 0 : index
    %c0_4 = arith.constant 0 : index
    %c0_5 = arith.constant 0 : index
    %2 = vector.load %arg3[%c0_2, %c0_3, %c0_4, %c0_5] : memref<1x1x2x4xf32, #tpu.memory_space<vmem>>, vector<1x1x2x4xf32>
    %3 = vector.shape_cast %2 : vector<1x1x2x4xf32> to vector<2x4xf32>
    %4 = tpu.iota {dimensions = array<i32: 0>} : vector<8x4xi32>
    %c0_i32 = arith.constant 0 : i32
    %5 = vector.broadcast %c0_i32 : i32 to vector<8x4xi32>
    %6 = arith.cmpi eq, %4, %5 : vector<8x4xi32>
    %7 = vector.extract_strided_slice %3 {offsets = [0, 0], sizes = [1, 4], strides = [1, 1]} : vector<2x4xf32> to vector<1x4xf32>
    %c1_i32 = arith.constant 1 : i32
    %8 = tpu.dynamic_rotate %1 by %c1_i32 dim 0 : vector<8x4xf32>, i32 -> vector<8x4xf32>
    %9 = vector.shape_cast %7 : vector<1x4xf32> to vector<1x4xf32>
    %10 = vector.broadcast %9 : vector<1x4xf32> to vector<8x4xf32>
    %11 = arith.select %6, %10, %8 : vector<8x4xi1>, vector<8x4xf32>
    %c7_i32 = arith.constant 7 : i32
    %12 = vector.broadcast %c7_i32 : i32 to vector<8x4xi32>
    %13 = arith.cmpi eq, %4, %12 : vector<8x4xi32>
    %14 = vector.extract_strided_slice %3 {offsets = [1, 0], sizes = [1, 4], strides = [1, 1]} : vector<2x4xf32> to vector<1x4xf32>
    %c7_i32_6 = arith.constant 7 : i32
    %15 = tpu.dynamic_rotate %1 by %c7_i32_6 dim 0 : vector<8x4xf32>, i32 -> vector<8x4xf32>
    %16 = vector.shape_cast %14 : vector<1x4xf32> to vector<1x4xf32>
    %17 = vector.broadcast %16 : vector<1x4xf32> to vector<8x4xf32>
    %18 = arith.select %13, %17, %15 : vector<8x4xi1>, vector<8x4xf32>
    %c0_7 = arith.constant 0 : index
    %c0_8 = arith.constant 0 : index
    %c0_9 = arith.constant 0 : index
    %19 = vector.load %arg4[%c0_7, %c0_8, %c0_9] : memref<3x4x128xf32, #tpu.memory_space<vmem>>, vector<1x4x128xf32>
    %20 = vector.shape_cast %19 : vector<1x4x128xf32> to vector<4x128xf32>
    %cst = arith.constant dense<0.000000e+00> : vector<8x128xf32>
    %21 = tpu.matmul %11, %20, %cst {dimension_numbers = #tpu.dot_dimension_numbers<[1], [0], [0], [1], [0, 0, 1, 1], [], []>} : vector<8x4xf32>, vector<4x128xf32>, vector<8x128xf32> -> vector<8x128xf32>
    %c1 = arith.constant 1 : index
    %c0_10 = arith.constant 0 : index
    %c0_11 = arith.constant 0 : index
    %22 = vector.load %arg4[%c1, %c0_10, %c0_11] : memref<3x4x128xf32, #tpu.memory_space<vmem>>, vector<1x4x128xf32>
    %23 = vector.shape_cast %22 : vector<1x4x128xf32> to vector<4x128xf32>
    %cst_12 = arith.constant dense<0.000000e+00> : vector<8x128xf32>
    %24 = tpu.matmul %1, %23, %cst_12 {dimension_numbers = #tpu.dot_dimension_numbers<[1], [0], [0], [1], [0, 0, 1, 1], [], []>} : vector<8x4xf32>, vector<4x128xf32>, vector<8x128xf32> -> vector<8x128xf32>
    %25 = arith.addf %21, %24 : vector<8x128xf32>
    %c2 = arith.constant 2 : index
    %c0_13 = arith.constant 0 : index
    %c0_14 = arith.constant 0 : index
    %26 = vector.load %arg4[%c2, %c0_13, %c0_14] : memref<3x4x128xf32, #tpu.memory_space<vmem>>, vector<1x4x128xf32>
    %27 = vector.shape_cast %26 : vector<1x4x128xf32> to vector<4x128xf32>
    %cst_15 = arith.constant dense<0.000000e+00> : vector<8x128xf32>
    %28 = tpu.matmul %18, %27, %cst_15 {dimension_numbers = #tpu.dot_dimension_numbers<[1], [0], [0], [1], [0, 0, 1, 1], [], []>} : vector<8x4xf32>, vector<4x128xf32>, vector<8x128xf32> -> vector<8x128xf32>
    %29 = arith.addf %25, %28 : vector<8x128xf32>
    %c0_16 = arith.constant 0 : index
    %c0_17 = arith.constant 0 : index
    %30 = vector.load %arg5[%c0_16, %c0_17] : memref<8x128xf32, #tpu.memory_space<vmem>>, vector<8x128xf32>
    %31 = arith.addf %29, %30 : vector<8x128xf32>
    %c0_18 = arith.constant 0 : index
    %c0_19 = arith.constant 0 : index
    %c0_20 = arith.constant 0 : index
    %32 = vector.load %arg6[%c0_18, %c0_19, %c0_20] : memref<1x8x128xf32, #tpu.memory_space<vmem>>, vector<1x8x128xf32>
    %33 = vector.shape_cast %32 : vector<1x8x128xf32> to vector<8x128xf32>
    %34 = vector.shape_cast %31 : vector<8x128xf32> to vector<1x8x128xf32>
    tpu.vector_store %arg6[%c0_18, %c0_19, %c0_20], %34 {strides = array<i32>} : memref<1x8x128xf32, #tpu.memory_space<vmem>>, vector<1x8x128xf32>,
    return
  }
  func.func @transform_0(%arg0: i32, %arg1: i32) -> (i32, i32, i32) {
    %c0_i32 = arith.constant 0 : i32
    %c0_i32_0 = arith.constant 0 : i32
    return %arg0, %arg1, %c0_i32 : i32, i32, i32
  }
  func.func @transform_1(%arg0: i32, %arg1: i32) -> (i32, i32, i32, i32) {
    %c0_i32 = arith.constant 0 : i32
    %c0_i32_0 = arith.constant 0 : i32
    %c0_i32_1 = arith.constant 0 : i32
    return %arg0, %arg1, %c0_i32, %c0_i32_0 : i32, i32, i32, i32
  }
  func.func @transform_2(%arg0: i32, %arg1: i32) -> (i32, i32, i32) {
    %c0_i32 = arith.constant 0 : i32
    %c0_i32_0 = arith.constant 0 : i32
    %c0_i32_1 = arith.constant 0 : i32
    %c0_i32_2 = arith.constant 0 : i32
    return %c0_i32, %c0_i32_0, %c0_i32_1 : i32, i32, i32
  }
  func.func @transform_3(%arg0: i32, %arg1: i32) -> (i32, i32) {
    %c0_i32 = arith.constant 0 : i32
    %c0_i32_0 = arith.constant 0 : i32
    return %arg1, %c0_i32 : i32, i32
  }
  func.func @transform_4(%arg0: i32, %arg1: i32) -> (i32, i32, i32) {
    %c0_i32 = arith.constant 0 : i32
    %c0_i32_0 = arith.constant 0 : i32
    return %arg0, %arg1, %c0_i32 : i32, i32, i32
  }
}

module attributes {stable_mosaic.version = 11 : i64} {
  func.func @data_embedding_kernel(%arg0: i32, %arg1: i32, %arg2: memref<1x8x4xf32, #tpu.memory_space<vmem>>, %arg3: memref<1x1x2x4xf32, #tpu.memory_space<vmem>>, %arg4: memref<3x4x128xf32, #tpu.memory_space<vmem>>, %arg5: memref<8x128xf32, #tpu.memory_space<vmem>>, %arg6: memref<1x8x128xf32, #tpu.memory_space<vmem>>) attributes {dimension_semantics = [#tpu.dimension_semantics<parallel>, #tpu.dimension_semantics<parallel>], iteration_bounds = array<i64: 2, 1>, scalar_prefetch = 0 : i64, scratch_operands = 0 : i64, tpu.core_type = #tpu.core_type<tc>, window_params = [{transform_indices = @transform_0, window_bounds = array<i64: 1, 8, 4>}, {transform_indices = @transform_1, window_bounds = array<i64: 1, 1, 2, 4>}, {pipeline_mode = #tpu.pipeline_mode<synchronous>, transform_indices = @transform_2, window_bounds = array<i64: 3, 4, 128>}, {transform_indices = @transform_3, window_bounds = array<i64: 8, 128>}, {transform_indices = @transform_4, window_bounds = array<i64: 1, 8, 128>}]} {
    %c0 = arith.constant 0 : index
    %c0_0 = arith.constant 0 : index
    %c0_1 = arith.constant 0 : index
    %0 = vector.load %arg2[%c0, %c0_0, %c0_1] : memref<1x8x4xf32, #tpu.memory_space<vmem>>, vector<1x8x4xf32>
    %1 = vector.shape_cast %0 : vector<1x8x4xf32> to vector<8x4xf32>
    %c0_2 = arith.constant 0 : index
    %c0_3 = arith.constant 0 : index
    %c0_4 = arith.constant 0 : index
    %c0_5 = arith.constant 0 : index
    %2 = vector.load %arg3[%c0_2, %c0_3, %c0_4, %c0_5] : memref<1x1x2x4xf32, #tpu.memory_space<vmem>>, vector<1x1x2x4xf32>
    %3 = vector.shape_cast %2 : vector<1x1x2x4xf32> to vector<2x4xf32>
    %4 = tpu.iota {dimensions = array<i32: 0>} : vector<8x4xi32>
    %c0_i32 = arith.constant 0 : i32
    %5 = vector.broadcast %c0_i32 : i32 to vector<8x4xi32>
    %6 = arith.cmpi eq, %4, %5 : vector<8x4xi32>
    %7 = vector.extract_strided_slice %3 {offsets = [0, 0], sizes = [1, 4], strides = [1, 1]} : vector<2x4xf32> to vector<1x4xf32>
    %c1_i32 = arith.constant 1 : i32
    %8 = tpu.dynamic_rotate %1 by %c1_i32 dim 0 : vector<8x4xf32>, i32 -> vector<8x4xf32>
    %9 = vector.shape_cast %7 : vector<1x4xf32> to vector<1x4xf32>
    %10 = vector.broadcast %9 : vector<1x4xf32> to vector<8x4xf32>
    %11 = arith.select %6, %10, %8 : vector<8x4xi1>, vector<8x4xf32>
    %c7_i32 = arith.constant 7 : i32
    %12 = vector.broadcast %c7_i32 : i32 to vector<8x4xi32>
    %13 = arith.cmpi eq, %4, %12 : vector<8x4xi32>
    %14 = vector.extract_strided_slice %3 {offsets = [1, 0], sizes = [1, 4], strides = [1, 1]} : vector<2x4xf32> to vector<1x4xf32>
    %c7_i32_6 = arith.constant 7 : i32
    %15 = tpu.dynamic_rotate %1 by %c7_i32_6 dim 0 : vector<8x4xf32>, i32 -> vector<8x4xf32>
    %16 = vector.shape_cast %14 : vector<1x4xf32> to vector<1x4xf32>
    %17 = vector.broadcast %16 : vector<1x4xf32> to vector<8x4xf32>
    %18 = arith.select %13, %17, %15 : vector<8x4xi1>, vector<8x4xf32>
    %c0_7 = arith.constant 0 : index
    %c0_8 = arith.constant 0 : index
    %c0_9 = arith.constant 0 : index
    %19 = vector.load %arg4[%c0_7, %c0_8, %c0_9] : memref<3x4x128xf32, #tpu.memory_space<vmem>>, vector<1x4x128xf32>
    %20 = vector.shape_cast %19 : vector<1x4x128xf32> to vector<4x128xf32>
    %cst = arith.constant dense<0.000000e+00> : vector<8x128xf32>
    %21 = tpu.matmul %11, %20, %cst {dimension_numbers = #tpu.dot_dimension_numbers<[1], [0], [0], [1], [0, 0, 1, 1], [], []>} : vector<8x4xf32>, vector<4x128xf32>, vector<8x128xf32> -> vector<8x128xf32>
    %c1 = arith.constant 1 : index
    %c0_10 = arith.constant 0 : index
    %c0_11 = arith.constant 0 : index
    %22 = vector.load %arg4[%c1, %c0_10, %c0_11] : memref<3x4x128xf32, #tpu.memory_space<vmem>>, vector<1x4x128xf32>
    %23 = vector.shape_cast %22 : vector<1x4x128xf32> to vector<4x128xf32>
    %cst_12 = arith.constant dense<0.000000e+00> : vector<8x128xf32>
    %24 = tpu.matmul %1, %23, %cst_12 {dimension_numbers = #tpu.dot_dimension_numbers<[1], [0], [0], [1], [0, 0, 1, 1], [], []>} : vector<8x4xf32>, vector<4x128xf32>, vector<8x128xf32> -> vector<8x128xf32>
    %25 = arith.addf %21, %24 : vector<8x128xf32>
    %c2 = arith.constant 2 : index
    %c0_13 = arith.constant 0 : index
    %c0_14 = arith.constant 0 : index
    %26 = vector.load %arg4[%c2, %c0_13, %c0_14] : memref<3x4x128xf32, #tpu.memory_space<vmem>>, vector<1x4x128xf32>
    %27 = vector.shape_cast %26 : vector<1x4x128xf32> to vector<4x128xf32>
    %cst_15 = arith.constant dense<0.000000e+00> : vector<8x128xf32>
    %28 = tpu.matmul %18, %27, %cst_15 {dimension_numbers = #tpu.dot_dimension_numbers<[1], [0], [0], [1], [0, 0, 1, 1], [], []>} : vector<8x4xf32>, vector<4x128xf32>, vector<8x128xf32> -> vector<8x128xf32>
    %29 = arith.addf %25, %28 : vector<8x128xf32>
    %c0_16 = arith.constant 0 : index
    %c0_17 = arith.constant 0 : index
    %30 = vector.load %arg5[%c0_16, %c0_17] : memref<8x128xf32, #tpu.memory_space<vmem>>, vector<8x128xf32>
    %31 = arith.addf %29, %30 : vector<8x128xf32>
    %c0_18 = arith.constant 0 : index
    %c0_19 = arith.constant 0 : index
    %c0_20 = arith.constant 0 : index
    %32 = vector.load %arg6[%c0_18, %c0_19, %c0_20] : memref<1x8x128xf32, #tpu.memory_space<vmem>>, vector<1x8x128xf32>
    %33 = vector.shape_cast %32 : vector<1x8x128xf32> to vector<8x128xf32>
    %34 = vector.shape_cast %31 : vector<8x128xf32> to vector<1x8x128xf32>
    tpu.vector_store %arg6[%c0_18, %c0_19, %c0_20], %34 {strides = array<i32>} : memref<1x8x128xf32, #tpu.memory_space<vmem>>, vector<1x8x128xf32>,
    return
  }
  func.func @transform_0(%arg0: i32, %arg1: i32) -> (i32, i32, i32) {
    %c0_i32 = arith.constant 0 : i32
    %c0_i32_0 = arith.constant 0 : i32
    return %arg0, %arg1, %c0_i32 : i32, i32, i32
  }
  func.func @transform_1(%arg0: i32, %arg1: i32) -> (i32, i32, i32, i32) {
    %c0_i32 = arith.constant 0 : i32
    %c0_i32_0 = arith.constant 0 : i32
    %c0_i32_1 = arith.constant 0 : i32
    return %arg0, %arg1, %c0_i32, %c0_i32_0 : i32, i32, i32, i32
  }
  func.func @transform_2(%arg0: i32, %arg1: i32) -> (i32, i32, i32) {
    %c0_i32 = arith.constant 0 : i32
    %c0_i32_0 = arith.constant 0 : i32
    %c0_i32_1 = arith.constant 0 : i32
    %c0_i32_2 = arith.constant 0 : i32
    return %c0_i32, %c0_i32_0, %c0_i32_1 : i32, i32, i32
  }
  func.func @transform_3(%arg0: i32, %arg1: i32) -> (i32, i32) {
    %c0_i32 = arith.constant 0 : i32
    %c0_i32_0 = arith.constant 0 : i32
    return %arg1, %c0_i32 : i32, i32
  }
  func.func @transform_4(%arg0: i32, %arg1: i32) -> (i32, i32, i32) {
    %c0_i32 = arith.constant 0 : i32
    %c0_i32_0 = arith.constant 0 : i32
    return %arg0, %arg1, %c0_i32 : i32, i32, i32
  }
}

</mosaic_0001>

<llo_original>
// kernel: tpu_custom_call.1
$region0: #{tpu_custom_call.1}
  #allocation0 [shape = 'u32[]', space=smem, size = 0x4, offset = 0x4, fixed_abs, tag = 'smem constant byte address 0x4 - core index']
  #allocation1 [shape = 'u32[144,128]{1,0:T(1,128)}', space=vmem, size = 0x12000, scoped, tag = 'internal scratch']
  %s0 = inlined_call_operand.vmem [shape: f32[2,8,4], index: 0, kind: input, shape index: {}]
  %s1 = inlined_call_operand.vmem [shape: f32[2,1,2,4], index: 1, kind: input, shape index: {}]
  %s2 = inlined_call_operand.vmem [shape: f32[3,4,128], index: 2, kind: input, shape index: {}]
  %s3 = inlined_call_operand.vmem [shape: f32[8,128], index: 3, kind: input, shape index: {}]
  %s4 = inlined_call_operand.hbm [shape: f32[2,8,128], index: 4, kind: output, shape index: {}]
  %s5 = sld [smem:[#allocation0]]
  $region49: #{tpu_custom_call.1} parent=0
    _
  %s7 = ssub.s32 1, %s5
  %s8 = scalar_select 0, %s7, %s5
  $region1: #{tpu_custom_call.1} parent=0
    #allocation2 [shape = 'u8[8192]{0}', space=vmem, size = 0x2000, scoped, tag = 'output window, operand 0']
    #allocation3 [shape = 's32[2]{0}', space=sflag, size = 0x8, scoped, tag = 'scoped memory for tpu_custom_call.1']
    %9 = vsyncpa [#allocation3], 0
    %s10 = scalar_lea.sflag [#allocation3], 1
    %11 = vsyncpa %s10, 0
    loop: start=0, step=1, limit=4
    $region2: #{tpu_custom_call.1} parent=1 // loop_pre_header
      _
    $region3: #{tpu_custom_call.1} parent=1 // loop_header
      %s13 = sphi 0, %s17
      %p14 = scmp.ge.s32.totalorder %s13, 4
      %s20 = sphi 0, %s32
      %s21 = sphi 0, %s28
      %s22 = sphi 0, %s20
      %s23 = sphi 0, %s21
      %s24 = sphi 0, %s22
      %s25 = sphi 0, %s23
      %s37 = sphi 0, %s39
      %s40 = sphi 0, %s37
      %s41 = sphi 0, %s40
      %s57 = sphi 0, %s41
      %s65 = sphi 0, %s67
      %s68 = sphi 0, %s65
      %s69 = sphi 0, %s68
      %s85 = sphi 0, %s69
      %s89 = sphi 0, %s89
      %s91 = sphi 0, %s89
      %s92 = sphi 0, %s91
      %s106 = sphi 0, %s92
      %s112 = sphi 0, %s114
      %s115 = sphi 0, %s112
      %s116 = sphi 0, %s115
      %s132 = sphi 0, %s116
      %s140 = sphi 0, %s142
      %s143 = sphi 0, %s140
      %s144 = sphi 0, %s143
      %s160 = sphi 0, %s144
    $region4: #{tpu_custom_call.1} parent=1 // loop_header_branch
      %16 = sbr.rel (%p14) target = $region8
    $region5: #{tpu_custom_call.1} parent=1 // loop_body
      %s18 = ssub.s32 %s13, 1
      %s19 = ssub.s32 %s13, 2
      %s26 = sadd.s32 1, %s21
      %p27 = scmp.ge.s32.totalorder %s26, 1
      %s28 = scalar_select %p27, 0, %s26
      %s29 = sadd.s32 1, %s20
      %s30 = scalar_select %p27, %s29, %s20
      %p31 = scmp.ge.s32.totalorder %s30, 2
      %s32 = scalar_select %p31, 0, %s30
      %s33 = ssub.s32 %s20, %s32
      %s34 = ssub.s32 %s21, %s28
      %s35 = sor.u32 %s33, %s34
      %p36 = scmp.eq.s32.totalorder %s35, 0
      %s38 = sadd.s32 %s37, 1
      %s39 = scalar_select %p36, %s37, %s38
      %p42 = pneg %p36
      %p43 = scmp.eq.s32.totalorder %s13, 1
      %p44 = por %p42, %p43
      %p45 = scmp.ne.s32.totalorder %s37, %s40
      %p46 = scmp.eq.s32.totalorder %s13, 0
      %p47 = por %p45, %p46
      %p48 = scmp.ne.s32.totalorder %s37, %s40
      %p49 = scmp.eq.s32.totalorder %s18, 1
      %p50 = por %p48, %p49
      %p51 = scmp.ne.s32.totalorder %s40, %s41
      %p52 = scmp.eq.s32.totalorder %s18, 0
      %p53 = por %p51, %p52
      %p54 = scmp.ne.s32.totalorder %s40, %s41
      %p55 = scmp.eq.s32.totalorder %s19, 1
      %p56 = por %p54, %p55
      %p58 = scmp.ne.s32.totalorder %s41, %s57
      %p59 = scmp.eq.s32.totalorder %s19, 0
      %p60 = por %p58, %p59
      %s61 = ssub.s32 %s20, %s32
      %s62 = ssub.s32 %s21, %s28
      %s63 = sor.u32 %s61, %s62
      %p64 = scmp.eq.s32.totalorder %s63, 0
      %s66 = sadd.s32 %s65, 1
      %s67 = scalar_select %p64, %s65, %s66
      %p70 = pneg %p64
      %p71 = scmp.eq.s32.totalorder %s13, 1
      %p72 = por %p70, %p71
      %p73 = scmp.ne.s32.totalorder %s65, %s68
      %p74 = scmp.eq.s32.totalorder %s13, 0
      %p75 = por %p73, %p74
      %p76 = scmp.ne.s32.totalorder %s65, %s68
      %p77 = scmp.eq.s32.totalorder %s18, 1
      %p78 = por %p76, %p77
      %p79 = scmp.ne.s32.totalorder %s68, %s69
      %p80 = scmp.eq.s32.totalorder %s18, 0
      %p81 = por %p79, %p80
      %p82 = scmp.ne.s32.totalorder %s68, %s69
      %p83 = scmp.eq.s32.totalorder %s19, 1
      %p84 = por %p82, %p83
      %p86 = scmp.ne.s32.totalorder %s69, %s85
      %p87 = scmp.eq.s32.totalorder %s19, 0
      %p88 = por %p86, %p87
      %s90 = sadd.s32 %s89, 1
      %p93 = scmp.eq.s32.totalorder %s13, 1
      %p94 = scmp.ne.s32.totalorder %s89, %s91
      %p95 = scmp.eq.s32.totalorder %s13, 0
      %p96 = por %p94, %p95
      %p97 = scmp.ne.s32.totalorder %s89, %s91
      %p98 = scmp.eq.s32.totalorder %s18, 1
      %p99 = por %p97, %p98
      %p100 = scmp.ne.s32.totalorder %s91, %s92
      %p101 = scmp.eq.s32.totalorder %s18, 0
      %p102 = por %p100, %p101
      %p103 = scmp.ne.s32.totalorder %s91, %s92
      %p104 = scmp.eq.s32.totalorder %s19, 1
      %p105 = por %p103, %p104
      %p107 = scmp.ne.s32.totalorder %s92, %s106
      %p108 = scmp.eq.s32.totalorder %s19, 0
      %p109 = por %p107, %p108
      %s110 = ssub.s32 %s21, %s28
      %p111 = scmp.eq.s32.totalorder %s110, 0
      %s113 = sadd.s32 %s112, 1
      %s114 = scalar_select %p111, %s112, %s113
      %p117 = pneg %p111
      %p118 = scmp.eq.s32.totalorder %s13, 1
      %p119 = por %p117, %p118
      %p120 = scmp.ne.s32.totalorder %s112, %s115
      %p121 = scmp.eq.s32.totalorder %s13, 0
      %p122 = por %p120, %p121
      %p123 = scmp.ne.s32.totalorder %s112, %s115
      %p124 = scmp.eq.s32.totalorder %s18, 1
      %p125 = por %p123, %p124
      %p126 = scmp.ne.s32.totalorder %s115, %s116
      %p127 = scmp.eq.s32.totalorder %s18, 0
      %p128 = por %p126, %p127
      %p129 = scmp.ne.s32.totalorder %s115, %s116
      %p130 = scmp.eq.s32.totalorder %s19, 1
      %p131 = por %p129, %p130
      %p133 = scmp.ne.s32.totalorder %s116, %s132
      %p134 = scmp.eq.s32.totalorder %s19, 0
      %p135 = por %p133, %p134
      %s136 = ssub.s32 %s20, %s32
      %s137 = ssub.s32 %s21, %s28
      %s138 = sor.u32 %s136, %s137
      %p139 = scmp.eq.s32.totalorder %s138, 0
      %s141 = sadd.s32 %s140, 1
      %s142 = scalar_select %p139, %s140, %s141
      %p145 = pneg %p139
      %p146 = scmp.eq.s32.totalorder %s13, 1
      %p147 = por %p145, %p146
      %p148 = scmp.ne.s32.totalorder %s140, %s143
      %p149 = scmp.eq.s32.totalorder %s13, 0
      %p150 = por %p148, %p149
      %p151 = scmp.ne.s32.totalorder %s140, %s143
      %p152 = scmp.eq.s32.totalorder %s18, 1
      %p153 = por %p151, %p152
      %p154 = scmp.ne.s32.totalorder %s143, %s144
      %p155 = scmp.eq.s32.totalorder %s18, 0
      %p156 = por %p154, %p155
      %p157 = scmp.ne.s32.totalorder %s143, %s144
      %p158 = scmp.eq.s32.totalorder %s19, 1
      %p159 = por %p157, %p158
      %p161 = scmp.ne.s32.totalorder %s144, %s160
      %p162 = scmp.eq.s32.totalorder %s19, 0
      %p163 = por %p161, %p162
      %p164 = scmp.le.s32.totalorder 1, %s13
      %p165 = scmp.lt.s32.totalorder %s13, 3
      %p166 = pnand %p164, %p165
      %p167 = pneg %p166
      // Predicated region
      $region9: #{tpu_custom_call.1} parent=5 // pred_check
        _
      $region10: #{tpu_custom_call.1} parent=5 // pred_check_branch
        %169 = sbr.rel (%p166) target = $region12
      $region11: #{tpu_custom_call.1} parent=5 // pred_region
        %s170 = ssub.s32 %s13, 1
        // Predicated region
        $region13: #{tpu_custom_call.1} parent=11 // pred_check
          %p171 = pneg %p102
        $region14: #{tpu_custom_call.1} parent=11 // pred_check_branch
          %173 = sbr.rel (%p171) target = $region16
        $region15: #{tpu_custom_call.1} parent=11 // pred_region
          _
        $region16: #{tpu_custom_call.1} parent=11 // pred_fallthru
          _
        // Predicated region
        $region17: #{tpu_custom_call.1} parent=11 // pred_check
          %p174 = pneg %p128
        $region18: #{tpu_custom_call.1} parent=11 // pred_check_branch
          %176 = sbr.rel (%p174) target = $region20
        $region19: #{tpu_custom_call.1} parent=11 // pred_region
          %p177 = scmp.lt.s32.totalorder %s23, 0
          %s178 = scalar_select %p177, %s23, 0
          %s179 = smul.addr %s178, 8
          %s180 = scalar_lea.vmem %s3, %s179
        $region20: #{tpu_custom_call.1} parent=11 // pred_fallthru
          _
      $region12: #{tpu_custom_call.1} parent=5 // pred_fallthru
        _
      %p181 = scmp.lt.s32.totalorder %s13, 2
      // Predicated region
      $region21: #{tpu_custom_call.1} parent=5 // pred_check
        %p182 = pneg %p181
      $region22: #{tpu_custom_call.1} parent=5 // pred_check_branch
        %184 = sbr.rel (%p182) target = $region24
      $region23: #{tpu_custom_call.1} parent=5 // pred_region
        // Predicated region
        $region25: #{tpu_custom_call.1} parent=23 // pred_check
          %p185 = pneg %p47
        $region26: #{tpu_custom_call.1} parent=23 // pred_check_branch
          %187 = sbr.rel (%p185) target = $region28
        $region27: #{tpu_custom_call.1} parent=23 // pred_region
          %p188 = scmp.lt.s32.totalorder %s20, 1
          %s189 = scalar_select %p188, %s20, 1
          %p190 = scmp.lt.s32.totalorder %s21, 0
          %s191 = scalar_select %p190, %s21, 0
          %s192 = sadd.s32 %s191, %s189
          %s193 = smul.addr %s192, 8
          %s194 = scalar_lea.vmem %s0, %s193
        $region28: #{tpu_custom_call.1} parent=23 // pred_fallthru
          _
        // Predicated region
        $region29: #{tpu_custom_call.1} parent=23 // pred_check
          %p195 = pneg %p75
        $region30: #{tpu_custom_call.1} parent=23 // pred_check_branch
          %197 = sbr.rel (%p195) target = $region32
        $region31: #{tpu_custom_call.1} parent=23 // pred_region
          %p198 = scmp.lt.s32.totalorder %s20, 1
          %s199 = scalar_select %p198, %s20, 1
          %p200 = scmp.lt.s32.totalorder %s21, 0
          %s201 = scalar_select %p200, %s21, 0
          %s202 = sadd.s32 %s201, %s199
          %s203 = smul.addr %s202, 2
          %s204 = scalar_lea.vmem %s1, %s203
        $region32: #{tpu_custom_call.1} parent=23 // pred_fallthru
          _
      $region24: #{tpu_custom_call.1} parent=5 // pred_fallthru
        _
      %p205 = scmp.le.s32.totalorder 1, %s13
      %p206 = scmp.lt.s32.totalorder %s13, 3
      %p207 = pnand %p205, %p206
      %p208 = pneg %p207
      // Predicated region
      $region33: #{tpu_custom_call.1} parent=5 // pred_check
        _
      $region34: #{tpu_custom_call.1} parent=5 // pred_check_branch
        %210 = sbr.rel (%p207) target = $region36
      $region35: #{tpu_custom_call.1} parent=5 // pred_region
        %s211 = ssub.s32 %s13, 1
        %p212 = scmp.lt.s32.totalorder %s22, 1
        %s213 = scalar_select %p212, %s22, 1
        %p214 = scmp.lt.s32.totalorder %s23, 0
        %s215 = scalar_select %p214, %s23, 0
        %s216 = sadd.s32 %s215, %s213
        %s217 = smul.addr %s216, 8
        %s218 = scalar_lea.vmem %s0, %s217
        %p219 = pneg %p53
        %p220 = pneg %p50
        %p221 = scmp.lt.s32.totalorder %s22, 1
        %s222 = scalar_select %p221, %s22, 1
        %p223 = scmp.lt.s32.totalorder %s23, 0
        %s224 = scalar_select %p223, %s23, 0
        %s225 = sadd.s32 %s224, %s222
        %s226 = smul.addr %s225, 2
        %s227 = scalar_lea.vmem %s1, %s226
        %p228 = pneg %p81
        %p229 = pneg %p78
        %p230 = pneg %p102
        %p231 = pneg %p99
        %p232 = scmp.lt.s32.totalorder %s23, 0
        %s233 = scalar_select %p232, %s23, 0
        %s234 = smul.addr %s233, 8
        %s235 = scalar_lea.vmem %s3, %s234
        %p236 = pneg %p128
        %p237 = pneg %p125
        %p238 = pneg %p156
        %p239 = pneg %p153
        %s240 = sand.u32 %s143, 1
        %s241 = scalar_lea.sflag [#allocation3], %s240
        %s242 = sand.u32 %s143, 1
        %s243 = smul.addr %s242, 8
        %s244 = scalar_lea.vmem [#allocation2], %s243
        %p245 = scmp.lt.s32.totalorder %s22, 1
        %s246 = scalar_select %p245, %s22, 1
        %p247 = scmp.lt.s32.totalorder %s23, 0
        %s248 = scalar_select %p247, %s23, 0
        %s249 = sadd.s32 %s248, %s246
        %s250 = smul.addr %s249, 8
        %s251 = scalar_lea.vmem %s0, %s250
        %p252 = scmp.lt.s32.totalorder %s22, 1
        %s253 = scalar_select %p252, %s22, 1
        %p254 = scmp.lt.s32.totalorder %s23, 0
        %s255 = scalar_select %p254, %s23, 0
        %s256 = sadd.s32 %s255, %s253
        %s257 = smul.addr %s256, 2
        %s258 = scalar_lea.vmem %s1, %s257
        %p259 = scmp.lt.s32.totalorder %s23, 0
        %s260 = scalar_select %p259, %s23, 0
        %s261 = smul.addr %s260, 8
        %s262 = scalar_lea.vmem %s3, %s261
        %v263 = vld [vmem:[%s251] sm:$0xff]
        %v264 = vld [vmem:[%s258] sm:$0x3]
        %v265 = vlaneseq
        %v266 = vshrl.u32 %v265, 7
        %vm267 = vcmp.eq.s32.totalorder %v266, 0
        %v268 = vrot.slane %v263, 7
        %v269 = vlaneseq
        %v270 = vshrl.u32 %v269, 7
        %v271 = vsub.s32 0, %v270
        %v272 = vrot.slane %v264, %v271
        %v273 = vsel %vm267, %v272, %v268
        %vm274 = vcmp.eq.s32.totalorder %v266, 7
        %v275 = vrot.slane %v263, 1
        %v276 = vlaneseq
        %v277 = vshrl.u32 %v276, 7
        %v278 = vsub.s32 1, %v277
        %v279 = vrot.slane %v264, %v278
        %v280 = vsel %vm274, %v279, %v275
        %v281 = vld [vmem:[%s2] sm:$0xf]
        %s282 = scalar_lea.vmem %s2, 4
        %v283 = vld [vmem:[%s282] sm:$0xf]
        %vm284 = vcmask 31744
        %v286 = vsel %vm284, %v263, 0
        %vm288 = vcmask 1043456
        %v290 = vsel %vm288, %v283, 0
        %292 = vmatprep.subr.mxu0 0.0
        %293 = vmatpush1.msra.mxu0 0.0
        %294 = vmatprep.subr.mxu0 0.0
        %295 = vmatpush1.msra.mxu0 0.0
        %296 = vmatprep.subr.mxu0 0.0
        %297 = vmatpush1.msra.mxu0 0.0
        %298 = vmatprep.subr.mxu0 0.0
        %299 = vmatpush1.msra.mxu0 0.0
        %300 = vmatprep.subr.mxu0 0.0
        %301 = vmatpush1.msra.mxu0 0.0
        %302 = vmatprep.subr.mxu0 0.0
        %303 = vmatpush1.msra.mxu0 0.0
        %304 = vmatprep.subr.mxu0 0.0
        %305 = vmatpush1.msra.mxu0 0.0
        %306 = vmatprep.subr.mxu0 0.0
        %307 = vmatpush1.msra.mxu0 0.0
        %308 = vmatprep.subr.mxu0 0.0
        %309 = vmatpush1.msra.mxu0 0.0
        %310 = vmatprep.subr.mxu0 0.0
        %311 = vmatpush1.msra.mxu0 0.0
        %312 = vmatprep.subr.mxu0 0.0
        %313 = vmatpush1.msra.mxu0 0.0
        %314 = vmatprep.subr.mxu0 0.0
        %315 = vmatpush1.msra.mxu0 0.0
        %316 = vmatprep.subr.mxu0 0.0
        %317 = vmatpush1.msra.mxu0 0.0
        %318 = vmatprep.subr.mxu0 0.0
        %319 = vmatpush1.msra.mxu0 0.0
        %320 = vmatprep.subr.mxu0 0.0
        %321 = vmatpush1.msra.mxu0 0.0
        %322 = vmatprep.subr.mxu0 0.0
        %323 = vmatpush1.msra.mxu0 %v290
        %324 = vmatprep.subr.mxu0 0.0
        %325 = vmatpush2.msra.mxu0 0.0
        %326 = vmatprep.subr.mxu0 0.0
        %327 = vmatpush2.msra.mxu0 0.0
        %328 = vmatprep.subr.mxu0 0.0
        %329 = vmatpush2.msra.mxu0 0.0
        %330 = vmatprep.subr.mxu0 0.0
        %331 = vmatpush2.msra.mxu0 0.0
        %332 = vmatprep.subr.mxu0 0.0
        %333 = vmatpush2.msra.mxu0 0.0
        %334 = vmatprep.subr.mxu0 0.0
        %335 = vmatpush2.msra.mxu0 0.0
        %336 = vmatprep.subr.mxu0 0.0
        %337 = vmatpush2.msra.mxu0 0.0
        %338 = vmatprep.subr.mxu0 0.0
        %339 = vmatpush2.msra.mxu0 0.0
        %340 = vmatprep.subr.mxu0 0.0
        %341 = vmatpush2.msra.mxu0 0.0
        %342 = vmatprep.subr.mxu0 0.0
        %343 = vmatpush2.msra.mxu0 0.0
        %344 = vmatprep.subr.mxu0 0.0
        %345 = vmatpush2.msra.mxu0 0.0
        %346 = vmatprep.subr.mxu0 0.0
        %347 = vmatpush2.msra.mxu0 0.0
        %348 = vmatprep.subr.mxu0 0.0
        %349 = vmatpush2.msra.mxu0 0.0
        %350 = vmatprep.subr.mxu0 0.0
        %351 = vmatpush2.msra.mxu0 0.0
        %352 = vmatprep.subr.mxu0 0.0
        %353 = vmatpush2.msra.mxu0 0.0
        %354 = vmatprep.subr.mxu0 0.0
        %355 = vmatpush2.msra.mxu0 0.0
        %356 = vmatprep.mubr.f32.mxu0 0.0
        %357 = vmatmul.mubr.f32.gmra.mxu0 %v286
        %v358 = vpop.f32.mrf.mxu0
        %v359 = vadd.f32 0.0, %v358
        %v360 = vpop.f32.mrf.mxu0
        %361 = vdwg.mxu0
        %v363 = vsel %vm284, %v273, 0
        %v366 = vsel %vm288, %v281, 0
        %368 = vmatprep.subr.mxu0 0.0
        %369 = vmatpush1.msra.mxu0 0.0
        %370 = vmatprep.subr.mxu0 0.0
        %371 = vmatpush1.msra.mxu0 0.0
        %372 = vmatprep.subr.mxu0 0.0
        %373 = vmatpush1.msra.mxu0 0.0
        %374 = vmatprep.subr.mxu0 0.0
        %375 = vmatpush1.msra.mxu0 0.0
        %376 = vmatprep.subr.mxu0 0.0
        %377 = vmatpush1.msra.mxu0 0.0
        %378 = vmatprep.subr.mxu0 0.0
        %379 = vmatpush1.msra.mxu0 0.0
        %380 = vmatprep.subr.mxu0 0.0
        %381 = vmatpush1.msra.mxu0 0.0
        %382 = vmatprep.subr.mxu0 0.0
        %383 = vmatpush1.msra.mxu0 0.0
        %384 = vmatprep.subr.mxu0 0.0
        %385 = vmatpush1.msra.mxu0 0.0
        %386 = vmatprep.subr.mxu0 0.0
        %387 = vmatpush1.msra.mxu0 0.0
        %388 = vmatprep.subr.mxu0 0.0
        %389 = vmatpush1.msra.mxu0 0.0
        %390 = vmatprep.subr.mxu0 0.0
        %391 = vmatpush1.msra.mxu0 0.0
        %392 = vmatprep.subr.mxu0 0.0
        %393 = vmatpush1.msra.mxu0 0.0
        %394 = vmatprep.subr.mxu0 0.0
        %395 = vmatpush1.msra.mxu0 0.0
        %396 = vmatprep.subr.mxu0 0.0
        %397 = vmatpush1.msra.mxu0 0.0
        %398 = vmatprep.subr.mxu0 0.0
        %399 = vmatpush1.msra.mxu0 %v366
        %400 = vmatprep.subr.mxu0 0.0
        %401 = vmatpush2.msra.mxu0 0.0
        %402 = vmatprep.subr.mxu0 0.0
        %403 = vmatpush2.msra.mxu0 0.0
        %404 = vmatprep.subr.mxu0 0.0
        %405 = vmatpush2.msra.mxu0 0.0
        %406 = vmatprep.subr.mxu0 0.0
        %407 = vmatpush2.msra.mxu0 0.0
        %408 = vmatprep.subr.mxu0 0.0
        %409 = vmatpush2.msra.mxu0 0.0
        %410 = vmatprep.subr.mxu0 0.0
        %411 = vmatpush2.msra.mxu0 0.0
        %412 = vmatprep.subr.mxu0 0.0
        %413 = vmatpush2.msra.mxu0 0.0
        %414 = vmatprep.subr.mxu0 0.0
        %415 = vmatpush2.msra.mxu0 0.0
        %416 = vmatprep.subr.mxu0 0.0
        %417 = vmatpush2.msra.mxu0 0.0
        %418 = vmatprep.subr.mxu0 0.0
        %419 = vmatpush2.msra.mxu0 0.0
        %420 = vmatprep.subr.mxu0 0.0
        %421 = vmatpush2.msra.mxu0 0.0
        %422 = vmatprep.subr.mxu0 0.0
        %423 = vmatpush2.msra.mxu0 0.0
        %424 = vmatprep.subr.mxu0 0.0
        %425 = vmatpush2.msra.mxu0 0.0
        %426 = vmatprep.subr.mxu0 0.0
        %427 = vmatpush2.msra.mxu0 0.0
        %428 = vmatprep.subr.mxu0 0.0
        %429 = vmatpush2.msra.mxu0 0.0
        %430 = vmatprep.subr.mxu0 0.0
        %431 = vmatpush2.msra.mxu0 0.0
        %432 = vmatprep.mubr.f32.mxu0 0.0
        %433 = vmatmul.mubr.f32.gmra.mxu0 %v363
        %v434 = vpop.f32.mrf.mxu0
        %v435 = vadd.f32 %v359, %v434
        %v436 = vpop.f32.mrf.mxu0
        %437 = vdwg.mxu0
        %s438 = scalar_lea.vmem %s2, 8
        %v439 = vld [vmem:[%s438] sm:$0xf]
        %v441 = vsel %vm284, %v280, 0
        %v444 = vsel %vm288, %v439, 0
        %446 = vmatprep.subr.mxu0 0.0
        %447 = vmatpush1.msra.mxu0 0.0
        %448 = vmatprep.subr.mxu0 0.0
        %449 = vmatpush1.msra.mxu0 0.0
        %450 = vmatprep.subr.mxu0 0.0
        %451 = vmatpush1.msra.mxu0 0.0
        %452 = vmatprep.subr.mxu0 0.0
        %453 = vmatpush1.msra.mxu0 0.0
        %454 = vmatprep.subr.mxu0 0.0
        %455 = vmatpush1.msra.mxu0 0.0
        %456 = vmatprep.subr.mxu0 0.0
        %457 = vmatpush1.msra.mxu0 0.0
        %458 = vmatprep.subr.mxu0 0.0
        %459 = vmatpush1.msra.mxu0 0.0
        %460 = vmatprep.subr.mxu0 0.0
        %461 = vmatpush1.msra.mxu0 0.0
        %462 = vmatprep.subr.mxu0 0.0
        %463 = vmatpush1.msra.mxu0 0.0
        %464 = vmatprep.subr.mxu0 0.0
        %465 = vmatpush1.msra.mxu0 0.0
        %466 = vmatprep.subr.mxu0 0.0
        %467 = vmatpush1.msra.mxu0 0.0
        %468 = vmatprep.subr.mxu0 0.0
        %469 = vmatpush1.msra.mxu0 0.0
        %470 = vmatprep.subr.mxu0 0.0
        %471 = vmatpush1.msra.mxu0 0.0
        %472 = vmatprep.subr.mxu0 0.0
        %473 = vmatpush1.msra.mxu0 0.0
        %474 = vmatprep.subr.mxu0 0.0
        %475 = vmatpush1.msra.mxu0 0.0
        %476 = vmatprep.subr.mxu0 0.0
        %477 = vmatpush1.msra.mxu0 %v444
        %478 = vmatprep.subr.mxu0 0.0
        %479 = vmatpush2.msra.mxu0 0.0
        %480 = vmatprep.subr.mxu0 0.0
        %481 = vmatpush2.msra.mxu0 0.0
        %482 = vmatprep.subr.mxu0 0.0
        %483 = vmatpush2.msra.mxu0 0.0
        %484 = vmatprep.subr.mxu0 0.0
        %485 = vmatpush2.msra.mxu0 0.0
        %486 = vmatprep.subr.mxu0 0.0
        %487 = vmatpush2.msra.mxu0 0.0
        %488 = vmatprep.subr.mxu0 0.0
        %489 = vmatpush2.msra.mxu0 0.0
        %490 = vmatprep.subr.mxu0 0.0
        %491 = vmatpush2.msra.mxu0 0.0
        %492 = vmatprep.subr.mxu0 0.0
        %493 = vmatpush2.msra.mxu0 0.0
        %494 = vmatprep.subr.mxu0 0.0
        %495 = vmatpush2.msra.mxu0 0.0
        %496 = vmatprep.subr.mxu0 0.0
        %497 = vmatpush2.msra.mxu0 0.0
        %498 = vmatprep.subr.mxu0 0.0
        %499 = vmatpush2.msra.mxu0 0.0
        %500 = vmatprep.subr.mxu0 0.0
        %501 = vmatpush2.msra.mxu0 0.0
        %502 = vmatprep.subr.mxu0 0.0
        %503 = vmatpush2.msra.mxu0 0.0
        %504 = vmatprep.subr.mxu0 0.0
        %505 = vmatpush2.msra.mxu0 0.0
        %506 = vmatprep.subr.mxu0 0.0
        %507 = vmatpush2.msra.mxu0 0.0
        %508 = vmatprep.subr.mxu0 0.0
        %509 = vmatpush2.msra.mxu0 0.0
        %510 = vmatprep.mubr.f32.mxu0 0.0
        %511 = vmatmul.mubr.f32.gmra.mxu0 %v441
        %v512 = vpop.f32.mrf.mxu0
        %v513 = vadd.f32 0.0, %v512
        %v514 = vpop.f32.mrf.mxu0
        %515 = vdwg.mxu0
        %v516 = vadd.f32 %v435, %v513
        %v517 = vld [vmem:[%s262] sm:$0xff]
        %v518 = vadd.f32 %v516, %v517
        %519 = vst [vmem:[%s244] sm:$0xff] %v518
        %s520 = sand.u32 %s143, 1
        %s521 = scalar_lea.sflag [#allocation3], %s520
        %s522 = sand.u32 %s143, 1
        %s523 = smul.addr %s522, 8
        %s524 = scalar_lea.vmem [#allocation2], %s523
        // Predicated region
        $region37: #{tpu_custom_call.1} parent=35 // pred_check
          %p525 = pneg %p153
        $region38: #{tpu_custom_call.1} parent=35 // pred_check_branch
          %527 = sbr.rel (%p525) target = $region40
        $region39: #{tpu_custom_call.1} parent=35 // pred_region
          %s529 = ssub.s32 128, 128
          %530 = vsyncadd %s521, %s529
          %s531 = sadd.s32 %s23, %s22
          %s532 = smul.addr %s531, 128
          %s533 = scalar_lea.hbm %s4, %s532
          %s535 = sshll.u32 %s524, 4
          %s536 = int_to_ptr.vmem [resolvable:$true] %s535
          %538 = dma.vmem_to_hbm [thread:$0]  %s536, 128, %s533, %s521
        $region40: #{tpu_custom_call.1} parent=35 // pred_fallthru
          _
      $region36: #{tpu_custom_call.1} parent=5 // pred_fallthru
        _
      %p539 = scmp.le.s32.totalorder 2, %s13
      // Predicated region
      $region41: #{tpu_custom_call.1} parent=5 // pred_check
        %p540 = pneg %p539
      $region42: #{tpu_custom_call.1} parent=5 // pred_check_branch
        %542 = sbr.rel (%p540) target = $region44
      $region43: #{tpu_custom_call.1} parent=5 // pred_region
        %s543 = ssub.s32 %s13, 2
        // Predicated region
        $region45: #{tpu_custom_call.1} parent=43 // pred_check
          %p544 = pneg %p159
        $region46: #{tpu_custom_call.1} parent=43 // pred_check_branch
          %546 = sbr.rel (%p544) target = $region48
        $region47: #{tpu_custom_call.1} parent=43 // pred_region
          %s547 = sand.u32 %s144, 1
          %s548 = scalar_lea.sflag [#allocation3], %s547
          %s549 = sand.u32 %s144, 1
          %s550 = smul.addr %s549, 8
          %s551 = scalar_lea.vmem [#allocation2], %s550
          %552 = dma.done %s548, 128
        $region48: #{tpu_custom_call.1} parent=43 // pred_fallthru
          _
      $region44: #{tpu_custom_call.1} parent=5 // pred_fallthru
        _
    $region6: #{tpu_custom_call.1} parent=1 // loop_footer
      %s17 = sadd.s32 1, %s13
    $region7: #{tpu_custom_call.1} parent=1 // loop_footer_branch
      %12 = sbr.rel target = $region3
    $region8: #{tpu_custom_call.1} parent=1 // loop_exit
      _
    %553 = vsyncpa [#allocation3], 1
    %s554 = scalar_lea.sflag [#allocation3], 1
    %555 = vsyncpa %s554, 1

// kernel: tpu_custom_call.1
$region0: #{tpu_custom_call.1}
  #allocation0 [shape = 'u32[]', space=smem, size = 0x4, offset = 0x4, fixed_abs, tag = 'smem constant byte address 0x4 - core index']
  #allocation1 [shape = 'u32[144,128]{1,0:T(1,128)}', space=vmem, size = 0x12000, scoped, tag = 'internal scratch']
  %s0 = inlined_call_operand.vmem [shape: f32[2,8,4], index: 0, kind: input, shape index: {}]
  %s1 = inlined_call_operand.vmem [shape: f32[2,1,2,4], index: 1, kind: input, shape index: {}]
  %s2 = inlined_call_operand.vmem [shape: f32[3,4,128], index: 2, kind: input, shape index: {}]
  %s3 = inlined_call_operand.vmem [shape: f32[8,128], index: 3, kind: input, shape index: {}]
  %s4 = inlined_call_operand.hbm [shape: f32[2,8,128], index: 4, kind: output, shape index: {}]
  %s5 = sld [smem:[#allocation0]]
  $region49: #{tpu_custom_call.1} parent=0
    _
  %s7 = ssub.s32 1, %s5
  %s8 = scalar_select 0, %s7, %s5
  $region1: #{tpu_custom_call.1} parent=0
    #allocation2 [shape = 'u8[8192]{0}', space=vmem, size = 0x2000, scoped, tag = 'output window, operand 0']
    #allocation3 [shape = 's32[2]{0}', space=sflag, size = 0x8, scoped, tag = 'scoped memory for tpu_custom_call.1']
    %9 = vsyncpa [#allocation3], 0
    %s10 = scalar_lea.sflag [#allocation3], 1
    %11 = vsyncpa %s10, 0
    loop: start=0, step=1, limit=4
    $region2: #{tpu_custom_call.1} parent=1 // loop_pre_header
      _
    $region3: #{tpu_custom_call.1} parent=1 // loop_header
      %s13 = sphi 0, %s17
      %p14 = scmp.ge.s32.totalorder %s13, 4
      %s20 = sphi 0, %s32
      %s21 = sphi 0, %s28
      %s22 = sphi 0, %s20
      %s23 = sphi 0, %s21
      %s24 = sphi 0, %s22
      %s25 = sphi 0, %s23
      %s37 = sphi 0, %s39
      %s40 = sphi 0, %s37
      %s41 = sphi 0, %s40
      %s57 = sphi 0, %s41
      %s65 = sphi 0, %s67
      %s68 = sphi 0, %s65
      %s69 = sphi 0, %s68
      %s85 = sphi 0, %s69
      %s89 = sphi 0, %s89
      %s91 = sphi 0, %s89
      %s92 = sphi 0, %s91
      %s106 = sphi 0, %s92
      %s112 = sphi 0, %s114
      %s115 = sphi 0, %s112
      %s116 = sphi 0, %s115
      %s132 = sphi 0, %s116
      %s140 = sphi 0, %s142
      %s143 = sphi 0, %s140
      %s144 = sphi 0, %s143
      %s160 = sphi 0, %s144
    $region4: #{tpu_custom_call.1} parent=1 // loop_header_branch
      %16 = sbr.rel (%p14) target = $region8
    $region5: #{tpu_custom_call.1} parent=1 // loop_body
      %s18 = ssub.s32 %s13, 1
      %s19 = ssub.s32 %s13, 2
      %s26 = sadd.s32 1, %s21
      %p27 = scmp.ge.s32.totalorder %s26, 1
      %s28 = scalar_select %p27, 0, %s26
      %s29 = sadd.s32 1, %s20
      %s30 = scalar_select %p27, %s29, %s20
      %p31 = scmp.ge.s32.totalorder %s30, 2
      %s32 = scalar_select %p31, 0, %s30
      %s33 = ssub.s32 %s20, %s32
      %s34 = ssub.s32 %s21, %s28
      %s35 = sor.u32 %s33, %s34
      %p36 = scmp.eq.s32.totalorder %s35, 0
      %s38 = sadd.s32 %s37, 1
      %s39 = scalar_select %p36, %s37, %s38
      %p42 = pneg %p36
      %p43 = scmp.eq.s32.totalorder %s13, 1
      %p44 = por %p42, %p43
      %p45 = scmp.ne.s32.totalorder %s37, %s40
      %p46 = scmp.eq.s32.totalorder %s13, 0
      %p47 = por %p45, %p46
      %p48 = scmp.ne.s32.totalorder %s37, %s40
      %p49 = scmp.eq.s32.totalorder %s18, 1
      %p50 = por %p48, %p49
      %p51 = scmp.ne.s32.totalorder %s40, %s41
      %p52 = scmp.eq.s32.totalorder %s18, 0
      %p53 = por %p51, %p52
      %p54 = scmp.ne.s32.totalorder %s40, %s41
      %p55 = scmp.eq.s32.totalorder %s19, 1
      %p56 = por %p54, %p55
      %p58 = scmp.ne.s32.totalorder %s41, %s57
      %p59 = scmp.eq.s32.totalorder %s19, 0
      %p60 = por %p58, %p59
      %s61 = ssub.s32 %s20, %s32
      %s62 = ssub.s32 %s21, %s28
      %s63 = sor.u32 %s61, %s62
      %p64 = scmp.eq.s32.totalorder %s63, 0
      %s66 = sadd.s32 %s65, 1
      %s67 = scalar_select %p64, %s65, %s66
      %p70 = pneg %p64
      %p71 = scmp.eq.s32.totalorder %s13, 1
      %p72 = por %p70, %p71
      %p73 = scmp.ne.s32.totalorder %s65, %s68
      %p74 = scmp.eq.s32.totalorder %s13, 0
      %p75 = por %p73, %p74
      %p76 = scmp.ne.s32.totalorder %s65, %s68
      %p77 = scmp.eq.s32.totalorder %s18, 1
      %p78 = por %p76, %p77
      %p79 = scmp.ne.s32.totalorder %s68, %s69
      %p80 = scmp.eq.s32.totalorder %s18, 0
      %p81 = por %p79, %p80
      %p82 = scmp.ne.s32.totalorder %s68, %s69
      %p83 = scmp.eq.s32.totalorder %s19, 1
      %p84 = por %p82, %p83
      %p86 = scmp.ne.s32.totalorder %s69, %s85
      %p87 = scmp.eq.s32.totalorder %s19, 0
      %p88 = por %p86, %p87
      %s90 = sadd.s32 %s89, 1
      %p93 = scmp.eq.s32.totalorder %s13, 1
      %p94 = scmp.ne.s32.totalorder %s89, %s91
      %p95 = scmp.eq.s32.totalorder %s13, 0
      %p96 = por %p94, %p95
      %p97 = scmp.ne.s32.totalorder %s89, %s91
      %p98 = scmp.eq.s32.totalorder %s18, 1
      %p99 = por %p97, %p98
      %p100 = scmp.ne.s32.totalorder %s91, %s92
      %p101 = scmp.eq.s32.totalorder %s18, 0
      %p102 = por %p100, %p101
      %p103 = scmp.ne.s32.totalorder %s91, %s92
      %p104 = scmp.eq.s32.totalorder %s19, 1
      %p105 = por %p103, %p104
      %p107 = scmp.ne.s32.totalorder %s92, %s106
      %p108 = scmp.eq.s32.totalorder %s19, 0
      %p109 = por %p107, %p108
      %s110 = ssub.s32 %s21, %s28
      %p111 = scmp.eq.s32.totalorder %s110, 0
      %s113 = sadd.s32 %s112, 1
      %s114 = scalar_select %p111, %s112, %s113
      %p117 = pneg %p111
      %p118 = scmp.eq.s32.totalorder %s13, 1
      %p119 = por %p117, %p118
      %p120 = scmp.ne.s32.totalorder %s112, %s115
      %p121 = scmp.eq.s32.totalorder %s13, 0
      %p122 = por %p120, %p121
      %p123 = scmp.ne.s32.totalorder %s112, %s115
      %p124 = scmp.eq.s32.totalorder %s18, 1
      %p125 = por %p123, %p124
      %p126 = scmp.ne.s32.totalorder %s115, %s116
      %p127 = scmp.eq.s32.totalorder %s18, 0
      %p128 = por %p126, %p127
      %p129 = scmp.ne.s32.totalorder %s115, %s116
      %p130 = scmp.eq.s32.totalorder %s19, 1
      %p131 = por %p129, %p130
      %p133 = scmp.ne.s32.totalorder %s116, %s132
      %p134 = scmp.eq.s32.totalorder %s19, 0
      %p135 = por %p133, %p134
      %s136 = ssub.s32 %s20, %s32
      %s137 = ssub.s32 %s21, %s28
      %s138 = sor.u32 %s136, %s137
      %p139 = scmp.eq.s32.totalorder %s138, 0
      %s141 = sadd.s32 %s140, 1
      %s142 = scalar_select %p139, %s140, %s141
      %p145 = pneg %p139
      %p146 = scmp.eq.s32.totalorder %s13, 1
      %p147 = por %p145, %p146
      %p148 = scmp.ne.s32.totalorder %s140, %s143
      %p149 = scmp.eq.s32.totalorder %s13, 0
      %p150 = por %p148, %p149
      %p151 = scmp.ne.s32.totalorder %s140, %s143
      %p152 = scmp.eq.s32.totalorder %s18, 1
      %p153 = por %p151, %p152
      %p154 = scmp.ne.s32.totalorder %s143, %s144
      %p155 = scmp.eq.s32.totalorder %s18, 0
      %p156 = por %p154, %p155
      %p157 = scmp.ne.s32.totalorder %s143, %s144
      %p158 = scmp.eq.s32.totalorder %s19, 1
      %p159 = por %p157, %p158
      %p161 = scmp.ne.s32.totalorder %s144, %s160
      %p162 = scmp.eq.s32.totalorder %s19, 0
      %p163 = por %p161, %p162
      %p164 = scmp.le.s32.totalorder 1, %s13
      %p165 = scmp.lt.s32.totalorder %s13, 3
      %p166 = pnand %p164, %p165
      %p167 = pneg %p166
      // Predicated region
      $region9: #{tpu_custom_call.1} parent=5 // pred_check
        _
      $region10: #{tpu_custom_call.1} parent=5 // pred_check_branch
        %169 = sbr.rel (%p166) target = $region12
      $region11: #{tpu_custom_call.1} parent=5 // pred_region
        %s170 = ssub.s32 %s13, 1
        // Predicated region
        $region13: #{tpu_custom_call.1} parent=11 // pred_check
          %p171 = pneg %p102
        $region14: #{tpu_custom_call.1} parent=11 // pred_check_branch
          %173 = sbr.rel (%p171) target = $region16
        $region15: #{tpu_custom_call.1} parent=11 // pred_region
          _
        $region16: #{tpu_custom_call.1} parent=11 // pred_fallthru
          _
        // Predicated region
        $region17: #{tpu_custom_call.1} parent=11 // pred_check
          %p174 = pneg %p128
        $region18: #{tpu_custom_call.1} parent=11 // pred_check_branch
          %176 = sbr.rel (%p174) target = $region20
        $region19: #{tpu_custom_call.1} parent=11 // pred_region
          %p177 = scmp.lt.s32.totalorder %s23, 0
          %s178 = scalar_select %p177, %s23, 0
          %s179 = smul.addr %s178, 8
          %s180 = scalar_lea.vmem %s3, %s179
        $region20: #{tpu_custom_call.1} parent=11 // pred_fallthru
          _
      $region12: #{tpu_custom_call.1} parent=5 // pred_fallthru
        _
      %p181 = scmp.lt.s32.totalorder %s13, 2
      // Predicated region
      $region21: #{tpu_custom_call.1} parent=5 // pred_check
        %p182 = pneg %p181
      $region22: #{tpu_custom_call.1} parent=5 // pred_check_branch
        %184 = sbr.rel (%p182) target = $region24
      $region23: #{tpu_custom_call.1} parent=5 // pred_region
        // Predicated region
        $region25: #{tpu_custom_call.1} parent=23 // pred_check
          %p185 = pneg %p47
        $region26: #{tpu_custom_call.1} parent=23 // pred_check_branch
          %187 = sbr.rel (%p185) target = $region28
        $region27: #{tpu_custom_call.1} parent=23 // pred_region
          %p188 = scmp.lt.s32.totalorder %s20, 1
          %s189 = scalar_select %p188, %s20, 1
          %p190 = scmp.lt.s32.totalorder %s21, 0
          %s191 = scalar_select %p190, %s21, 0
          %s192 = sadd.s32 %s191, %s189
          %s193 = smul.addr %s192, 8
          %s194 = scalar_lea.vmem %s0, %s193
        $region28: #{tpu_custom_call.1} parent=23 // pred_fallthru
          _
        // Predicated region
        $region29: #{tpu_custom_call.1} parent=23 // pred_check
          %p195 = pneg %p75
        $region30: #{tpu_custom_call.1} parent=23 // pred_check_branch
          %197 = sbr.rel (%p195) target = $region32
        $region31: #{tpu_custom_call.1} parent=23 // pred_region
          %p198 = scmp.lt.s32.totalorder %s20, 1
          %s199 = scalar_select %p198, %s20, 1
          %p200 = scmp.lt.s32.totalorder %s21, 0
          %s201 = scalar_select %p200, %s21, 0
          %s202 = sadd.s32 %s201, %s199
          %s203 = smul.addr %s202, 2
          %s204 = scalar_lea.vmem %s1, %s203
        $region32: #{tpu_custom_call.1} parent=23 // pred_fallthru
          _
      $region24: #{tpu_custom_call.1} parent=5 // pred_fallthru
        _
      %p205 = scmp.le.s32.totalorder 1, %s13
      %p206 = scmp.lt.s32.totalorder %s13, 3
      %p207 = pnand %p205, %p206
      %p208 = pneg %p207
      // Predicated region
      $region33: #{tpu_custom_call.1} parent=5 // pred_check
        _
      $region34: #{tpu_custom_call.1} parent=5 // pred_check_branch
        %210 = sbr.rel (%p207) target = $region36
      $region35: #{tpu_custom_call.1} parent=5 // pred_region
        %s211 = ssub.s32 %s13, 1
        %p212 = scmp.lt.s32.totalorder %s22, 1
        %s213 = scalar_select %p212, %s22, 1
        %p214 = scmp.lt.s32.totalorder %s23, 0
        %s215 = scalar_select %p214, %s23, 0
        %s216 = sadd.s32 %s215, %s213
        %s217 = smul.addr %s216, 8
        %s218 = scalar_lea.vmem %s0, %s217
        %p219 = pneg %p53
        %p220 = pneg %p50
        %p221 = scmp.lt.s32.totalorder %s22, 1
        %s222 = scalar_select %p221, %s22, 1
        %p223 = scmp.lt.s32.totalorder %s23, 0
        %s224 = scalar_select %p223, %s23, 0
        %s225 = sadd.s32 %s224, %s222
        %s226 = smul.addr %s225, 2
        %s227 = scalar_lea.vmem %s1, %s226
        %p228 = pneg %p81
        %p229 = pneg %p78
        %p230 = pneg %p102
        %p231 = pneg %p99
        %p232 = scmp.lt.s32.totalorder %s23, 0
        %s233 = scalar_select %p232, %s23, 0
        %s234 = smul.addr %s233, 8
        %s235 = scalar_lea.vmem %s3, %s234
        %p236 = pneg %p128
        %p237 = pneg %p125
        %p238 = pneg %p156
        %p239 = pneg %p153
        %s240 = sand.u32 %s143, 1
        %s241 = scalar_lea.sflag [#allocation3], %s240
        %s242 = sand.u32 %s143, 1
        %s243 = smul.addr %s242, 8
        %s244 = scalar_lea.vmem [#allocation2], %s243
        %p245 = scmp.lt.s32.totalorder %s22, 1
        %s246 = scalar_select %p245, %s22, 1
        %p247 = scmp.lt.s32.totalorder %s23, 0
        %s248 = scalar_select %p247, %s23, 0
        %s249 = sadd.s32 %s248, %s246
        %s250 = smul.addr %s249, 8
        %s251 = scalar_lea.vmem %s0, %s250
        %p252 = scmp.lt.s32.totalorder %s22, 1
        %s253 = scalar_select %p252, %s22, 1
        %p254 = scmp.lt.s32.totalorder %s23, 0
        %s255 = scalar_select %p254, %s23, 0
        %s256 = sadd.s32 %s255, %s253
        %s257 = smul.addr %s256, 2
        %s258 = scalar_lea.vmem %s1, %s257
        %p259 = scmp.lt.s32.totalorder %s23, 0
        %s260 = scalar_select %p259, %s23, 0
        %s261 = smul.addr %s260, 8
        %s262 = scalar_lea.vmem %s3, %s261
        %v263 = vld [vmem:[%s251] sm:$0xff]
        %v264 = vld [vmem:[%s258] sm:$0x3]
        %v265 = vlaneseq
        %v266 = vshrl.u32 %v265, 7
        %vm267 = vcmp.eq.s32.totalorder %v266, 0
        %v268 = vrot.slane %v263, 7
        %v269 = vlaneseq
        %v270 = vshrl.u32 %v269, 7
        %v271 = vsub.s32 0, %v270
        %v272 = vrot.slane %v264, %v271
        %v273 = vsel %vm267, %v272, %v268
        %vm274 = vcmp.eq.s32.totalorder %v266, 7
        %v275 = vrot.slane %v263, 1
        %v276 = vlaneseq
        %v277 = vshrl.u32 %v276, 7
        %v278 = vsub.s32 1, %v277
        %v279 = vrot.slane %v264, %v278
        %v280 = vsel %vm274, %v279, %v275
        %v281 = vld [vmem:[%s2] sm:$0xf]
        %s282 = scalar_lea.vmem %s2, 4
        %v283 = vld [vmem:[%s282] sm:$0xf]
        %vm284 = vcmask 31744
        %v286 = vsel %vm284, %v263, 0
        %vm288 = vcmask 1043456
        %v290 = vsel %vm288, %v283, 0
        %292 = vmatprep.subr.mxu0 0.0
        %293 = vmatpush1.msra.mxu0 0.0
        %294 = vmatprep.subr.mxu0 0.0
        %295 = vmatpush1.msra.mxu0 0.0
        %296 = vmatprep.subr.mxu0 0.0
        %297 = vmatpush1.msra.mxu0 0.0
        %298 = vmatprep.subr.mxu0 0.0
        %299 = vmatpush1.msra.mxu0 0.0
        %300 = vmatprep.subr.mxu0 0.0
        %301 = vmatpush1.msra.mxu0 0.0
        %302 = vmatprep.subr.mxu0 0.0
        %303 = vmatpush1.msra.mxu0 0.0
        %304 = vmatprep.subr.mxu0 0.0
        %305 = vmatpush1.msra.mxu0 0.0
        %306 = vmatprep.subr.mxu0 0.0
        %307 = vmatpush1.msra.mxu0 0.0
        %308 = vmatprep.subr.mxu0 0.0
        %309 = vmatpush1.msra.mxu0 0.0
        %310 = vmatprep.subr.mxu0 0.0
        %311 = vmatpush1.msra.mxu0 0.0
        %312 = vmatprep.subr.mxu0 0.0
        %313 = vmatpush1.msra.mxu0 0.0
        %314 = vmatprep.subr.mxu0 0.0
        %315 = vmatpush1.msra.mxu0 0.0
        %316 = vmatprep.subr.mxu0 0.0
        %317 = vmatpush1.msra.mxu0 0.0
        %318 = vmatprep.subr.mxu0 0.0
        %319 = vmatpush1.msra.mxu0 0.0
        %320 = vmatprep.subr.mxu0 0.0
        %321 = vmatpush1.msra.mxu0 0.0
        %322 = vmatprep.subr.mxu0 0.0
        %323 = vmatpush1.msra.mxu0 %v290
        %324 = vmatprep.subr.mxu0 0.0
        %325 = vmatpush2.msra.mxu0 0.0
        %326 = vmatprep.subr.mxu0 0.0
        %327 = vmatpush2.msra.mxu0 0.0
        %328 = vmatprep.subr.mxu0 0.0
        %329 = vmatpush2.msra.mxu0 0.0
        %330 = vmatprep.subr.mxu0 0.0
        %331 = vmatpush2.msra.mxu0 0.0
        %332 = vmatprep.subr.mxu0 0.0
        %333 = vmatpush2.msra.mxu0 0.0
        %334 = vmatprep.subr.mxu0 0.0
        %335 = vmatpush2.msra.mxu0 0.0
        %336 = vmatprep.subr.mxu0 0.0
        %337 = vmatpush2.msra.mxu0 0.0
        %338 = vmatprep.subr.mxu0 0.0
        %339 = vmatpush2.msra.mxu0 0.0
        %340 = vmatprep.subr.mxu0 0.0
        %341 = vmatpush2.msra.mxu0 0.0
        %342 = vmatprep.subr.mxu0 0.0
        %343 = vmatpush2.msra.mxu0 0.0
        %344 = vmatprep.subr.mxu0 0.0
        %345 = vmatpush2.msra.mxu0 0.0
        %346 = vmatprep.subr.mxu0 0.0
        %347 = vmatpush2.msra.mxu0 0.0
        %348 = vmatprep.subr.mxu0 0.0
        %349 = vmatpush2.msra.mxu0 0.0
        %350 = vmatprep.subr.mxu0 0.0
        %351 = vmatpush2.msra.mxu0 0.0
        %352 = vmatprep.subr.mxu0 0.0
        %353 = vmatpush2.msra.mxu0 0.0
        %354 = vmatprep.subr.mxu0 0.0
        %355 = vmatpush2.msra.mxu0 0.0
        %356 = vmatprep.mubr.f32.mxu0 0.0
        %357 = vmatmul.mubr.f32.gmra.mxu0 %v286
        %v358 = vpop.f32.mrf.mxu0
        %v359 = vadd.f32 0.0, %v358
        %v360 = vpop.f32.mrf.mxu0
        %361 = vdwg.mxu0
        %v363 = vsel %vm284, %v273, 0
        %v366 = vsel %vm288, %v281, 0
        %368 = vmatprep.subr.mxu0 0.0
        %369 = vmatpush1.msra.mxu0 0.0
        %370 = vmatprep.subr.mxu0 0.0
        %371 = vmatpush1.msra.mxu0 0.0
        %372 = vmatprep.subr.mxu0 0.0
        %373 = vmatpush1.msra.mxu0 0.0
        %374 = vmatprep.subr.mxu0 0.0
        %375 = vmatpush1.msra.mxu0 0.0
        %376 = vmatprep.subr.mxu0 0.0
        %377 = vmatpush1.msra.mxu0 0.0
        %378 = vmatprep.subr.mxu0 0.0
        %379 = vmatpush1.msra.mxu0 0.0
        %380 = vmatprep.subr.mxu0 0.0
        %381 = vmatpush1.msra.mxu0 0.0
        %382 = vmatprep.subr.mxu0 0.0
        %383 = vmatpush1.msra.mxu0 0.0
        %384 = vmatprep.subr.mxu0 0.0
        %385 = vmatpush1.msra.mxu0 0.0
        %386 = vmatprep.subr.mxu0 0.0
        %387 = vmatpush1.msra.mxu0 0.0
        %388 = vmatprep.subr.mxu0 0.0
        %389 = vmatpush1.msra.mxu0 0.0
        %390 = vmatprep.subr.mxu0 0.0
        %391 = vmatpush1.msra.mxu0 0.0
        %392 = vmatprep.subr.mxu0 0.0
        %393 = vmatpush1.msra.mxu0 0.0
        %394 = vmatprep.subr.mxu0 0.0
        %395 = vmatpush1.msra.mxu0 0.0
        %396 = vmatprep.subr.mxu0 0.0
        %397 = vmatpush1.msra.mxu0 0.0
        %398 = vmatprep.subr.mxu0 0.0
        %399 = vmatpush1.msra.mxu0 %v366
        %400 = vmatprep.subr.mxu0 0.0
        %401 = vmatpush2.msra.mxu0 0.0
        %402 = vmatprep.subr.mxu0 0.0
        %403 = vmatpush2.msra.mxu0 0.0
        %404 = vmatprep.subr.mxu0 0.0
        %405 = vmatpush2.msra.mxu0 0.0
        %406 = vmatprep.subr.mxu0 0.0
        %407 = vmatpush2.msra.mxu0 0.0
        %408 = vmatprep.subr.mxu0 0.0
        %409 = vmatpush2.msra.mxu0 0.0
        %410 = vmatprep.subr.mxu0 0.0
        %411 = vmatpush2.msra.mxu0 0.0
        %412 = vmatprep.subr.mxu0 0.0
        %413 = vmatpush2.msra.mxu0 0.0
        %414 = vmatprep.subr.mxu0 0.0
        %415 = vmatpush2.msra.mxu0 0.0
        %416 = vmatprep.subr.mxu0 0.0
        %417 = vmatpush2.msra.mxu0 0.0
        %418 = vmatprep.subr.mxu0 0.0
        %419 = vmatpush2.msra.mxu0 0.0
        %420 = vmatprep.subr.mxu0 0.0
        %421 = vmatpush2.msra.mxu0 0.0
        %422 = vmatprep.subr.mxu0 0.0
        %423 = vmatpush2.msra.mxu0 0.0
        %424 = vmatprep.subr.mxu0 0.0
        %425 = vmatpush2.msra.mxu0 0.0
        %426 = vmatprep.subr.mxu0 0.0
        %427 = vmatpush2.msra.mxu0 0.0
        %428 = vmatprep.subr.mxu0 0.0
        %429 = vmatpush2.msra.mxu0 0.0
        %430 = vmatprep.subr.mxu0 0.0
        %431 = vmatpush2.msra.mxu0 0.0
        %432 = vmatprep.mubr.f32.mxu0 0.0
        %433 = vmatmul.mubr.f32.gmra.mxu0 %v363
        %v434 = vpop.f32.mrf.mxu0
        %v435 = vadd.f32 %v359, %v434
        %v436 = vpop.f32.mrf.mxu0
        %437 = vdwg.mxu0
        %s438 = scalar_lea.vmem %s2, 8
        %v439 = vld [vmem:[%s438] sm:$0xf]
        %v441 = vsel %vm284, %v280, 0
        %v444 = vsel %vm288, %v439, 0
        %446 = vmatprep.subr.mxu0 0.0
        %447 = vmatpush1.msra.mxu0 0.0
        %448 = vmatprep.subr.mxu0 0.0
        %449 = vmatpush1.msra.mxu0 0.0
        %450 = vmatprep.subr.mxu0 0.0
        %451 = vmatpush1.msra.mxu0 0.0
        %452 = vmatprep.subr.mxu0 0.0
        %453 = vmatpush1.msra.mxu0 0.0
        %454 = vmatprep.subr.mxu0 0.0
        %455 = vmatpush1.msra.mxu0 0.0
        %456 = vmatprep.subr.mxu0 0.0
        %457 = vmatpush1.msra.mxu0 0.0
        %458 = vmatprep.subr.mxu0 0.0
        %459 = vmatpush1.msra.mxu0 0.0
        %460 = vmatprep.subr.mxu0 0.0
        %461 = vmatpush1.msra.mxu0 0.0
        %462 = vmatprep.subr.mxu0 0.0
        %463 = vmatpush1.msra.mxu0 0.0
        %464 = vmatprep.subr.mxu0 0.0
        %465 = vmatpush1.msra.mxu0 0.0
        %466 = vmatprep.subr.mxu0 0.0
        %467 = vmatpush1.msra.mxu0 0.0
        %468 = vmatprep.subr.mxu0 0.0
        %469 = vmatpush1.msra.mxu0 0.0
        %470 = vmatprep.subr.mxu0 0.0
        %471 = vmatpush1.msra.mxu0 0.0
        %472 = vmatprep.subr.mxu0 0.0
        %473 = vmatpush1.msra.mxu0 0.0
        %474 = vmatprep.subr.mxu0 0.0
        %475 = vmatpush1.msra.mxu0 0.0
        %476 = vmatprep.subr.mxu0 0.0
        %477 = vmatpush1.msra.mxu0 %v444
        %478 = vmatprep.subr.mxu0 0.0
        %479 = vmatpush2.msra.mxu0 0.0
        %480 = vmatprep.subr.mxu0 0.0
        %481 = vmatpush2.msra.mxu0 0.0
        %482 = vmatprep.subr.mxu0 0.0
        %483 = vmatpush2.msra.mxu0 0.0
        %484 = vmatprep.subr.mxu0 0.0
        %485 = vmatpush2.msra.mxu0 0.0
        %486 = vmatprep.subr.mxu0 0.0
        %487 = vmatpush2.msra.mxu0 0.0
        %488 = vmatprep.subr.mxu0 0.0
        %489 = vmatpush2.msra.mxu0 0.0
        %490 = vmatprep.subr.mxu0 0.0
        %491 = vmatpush2.msra.mxu0 0.0
        %492 = vmatprep.subr.mxu0 0.0
        %493 = vmatpush2.msra.mxu0 0.0
        %494 = vmatprep.subr.mxu0 0.0
        %495 = vmatpush2.msra.mxu0 0.0
        %496 = vmatprep.subr.mxu0 0.0
        %497 = vmatpush2.msra.mxu0 0.0
        %498 = vmatprep.subr.mxu0 0.0
        %499 = vmatpush2.msra.mxu0 0.0
        %500 = vmatprep.subr.mxu0 0.0
        %501 = vmatpush2.msra.mxu0 0.0
        %502 = vmatprep.subr.mxu0 0.0
        %503 = vmatpush2.msra.mxu0 0.0
        %504 = vmatprep.subr.mxu0 0.0
        %505 = vmatpush2.msra.mxu0 0.0
        %506 = vmatprep.subr.mxu0 0.0
        %507 = vmatpush2.msra.mxu0 0.0
        %508 = vmatprep.subr.mxu0 0.0
        %509 = vmatpush2.msra.mxu0 0.0
        %510 = vmatprep.mubr.f32.mxu0 0.0
        %511 = vmatmul.mubr.f32.gmra.mxu0 %v441
        %v512 = vpop.f32.mrf.mxu0
        %v513 = vadd.f32 0.0, %v512
        %v514 = vpop.f32.mrf.mxu0
        %515 = vdwg.mxu0
        %v516 = vadd.f32 %v435, %v513
        %v517 = vld [vmem:[%s262] sm:$0xff]
        %v518 = vadd.f32 %v516, %v517
        %519 = vst [vmem:[%s244] sm:$0xff] %v518
        %s520 = sand.u32 %s143, 1
        %s521 = scalar_lea.sflag [#allocation3], %s520
        %s522 = sand.u32 %s143, 1
        %s523 = smul.addr %s522, 8
        %s524 = scalar_lea.vmem [#allocation2], %s523
        // Predicated region
        $region37: #{tpu_custom_call.1} parent=35 // pred_check
          %p525 = pneg %p153
        $region38: #{tpu_custom_call.1} parent=35 // pred_check_branch
          %527 = sbr.rel (%p525) target = $region40
        $region39: #{tpu_custom_call.1} parent=35 // pred_region
          %s529 = ssub.s32 128, 128
          %530 = vsyncadd %s521, %s529
          %s531 = sadd.s32 %s23, %s22
          %s532 = smul.addr %s531, 128
          %s533 = scalar_lea.hbm %s4, %s532
          %s535 = sshll.u32 %s524, 4
          %s536 = int_to_ptr.vmem [resolvable:$true] %s535
          %538 = dma.vmem_to_hbm [thread:$0]  %s536, 128, %s533, %s521
        $region40: #{tpu_custom_call.1} parent=35 // pred_fallthru
          _
      $region36: #{tpu_custom_call.1} parent=5 // pred_fallthru
        _
      %p539 = scmp.le.s32.totalorder 2, %s13
      // Predicated region
      $region41: #{tpu_custom_call.1} parent=5 // pred_check
        %p540 = pneg %p539
      $region42: #{tpu_custom_call.1} parent=5 // pred_check_branch
        %542 = sbr.rel (%p540) target = $region44
      $region43: #{tpu_custom_call.1} parent=5 // pred_region
        %s543 = ssub.s32 %s13, 2
        // Predicated region
        $region45: #{tpu_custom_call.1} parent=43 // pred_check
          %p544 = pneg %p159
        $region46: #{tpu_custom_call.1} parent=43 // pred_check_branch
          %546 = sbr.rel (%p544) target = $region48
        $region47: #{tpu_custom_call.1} parent=43 // pred_region
          %s547 = sand.u32 %s144, 1
          %s548 = scalar_lea.sflag [#allocation3], %s547
          %s549 = sand.u32 %s144, 1
          %s550 = smul.addr %s549, 8
          %s551 = scalar_lea.vmem [#allocation2], %s550
          %552 = dma.done %s548, 128
        $region48: #{tpu_custom_call.1} parent=43 // pred_fallthru
          _
      $region44: #{tpu_custom_call.1} parent=5 // pred_fallthru
        _
    $region6: #{tpu_custom_call.1} parent=1 // loop_footer
      %s17 = sadd.s32 1, %s13
    $region7: #{tpu_custom_call.1} parent=1 // loop_footer_branch
      %12 = sbr.rel target = $region3
    $region8: #{tpu_custom_call.1} parent=1 // loop_exit
      _
    %553 = vsyncpa [#allocation3], 1
    %s554 = scalar_lea.sflag [#allocation3], 1
    %555 = vsyncpa %s554, 1

</llo_original>
